<compile_context>
chip_gen: v7x
topology: tpu7x:2x2x1
jax: 0.10.0
libtpu: 0.0.40
codegen_flags: <defaults>
</compile_context>

<pallas_src>
import functools
import math

import jax
import jax.numpy as jnp
from jax import lax
from jax.experimental import pallas as pl
from jax.experimental.pallas import tpu as pltpu

DENSE_TILE_M = 512                 # row tile for dense kernels (projections / fc+LN)
ATTN_TILE_Q = 256                  # query-row tile for the attention kernel
COMPUTE_DTYPE = jnp.bfloat16       # MXU operand dtype (accumulation stays f32)
_MASK_BIAS = -1e30                 # finite "minus infinity" (avoids NaN on fully-masked rows)


@functools.lru_cache(maxsize=None)
def _vmem_limit():
    """Generation-aware scoped-VMEM budget (~25% headroom below physical capacity)."""
    try:
        cap = getattr(pltpu.get_tpu_info(), "vmem_capacity_bytes", None)
        if cap:
            return int(cap) * 3 // 4            # ~96 MiB on v5e/v6e, ~48 MiB on v7x
    except Exception:
        pass
    return 48 * 1024 * 1024                     # safe on every generation (incl. v7x 64 MiB)


def _pick_tile(n, target, align=8):
    """Largest divisor of n that is <= target and a multiple of `align` (else n itself)."""
    if n <= target:
        return n
    for t in range(target, 0, -1):
        if n % t == 0 and t % align == 0:
            return t
    return n


# ---------------------------------------------------------------------------
# Kernel 1: row-tiled linear projection  o = x @ W + b
#   (also used for the fused QKV projection: W is the packed (d_model, 2hk+hv) weight,
#    output is ONE lane-dense packed store)
# ---------------------------------------------------------------------------
def _linear_kernel(x_ref, w_ref, b_ref, o_ref, *, compute_dtype):
    x = x_ref[...].astype(compute_dtype)
    w = w_ref[...].astype(compute_dtype)
    y = jnp.dot(x, w, preferred_element_type=jnp.float32)
    o_ref[...] = (y + b_ref[...].astype(jnp.float32)).astype(o_ref.dtype)


def linear(x2d, w, b, *, out_dtype=COMPUTE_DTYPE, tile_m=DENSE_TILE_M,
           compute_dtype=COMPUTE_DTYPE):
    n, d_in = x2d.shape
    d_out = w.shape[1]
    tm = min(tile_m, n)
    grid_m = pl.cdiv(n, tm)
    kernel = functools.partial(_linear_kernel, compute_dtype=compute_dtype)
    return pl.pallas_call(
        kernel,
        out_shape=jax.ShapeDtypeStruct((n, d_out), out_dtype),
        grid=(grid_m,),
        in_specs=[
            pl.BlockSpec((tm, d_in), lambda i: (i, 0)),
            pl.BlockSpec((d_in, d_out), lambda i: (0, 0)),
            pl.BlockSpec((1, d_out), lambda i: (0, 0)),
        ],
        out_specs=pl.BlockSpec((tm, d_out), lambda i: (i, 0)),
        compiler_params=pltpu.CompilerParams(
            dimension_semantics=("parallel",),
            vmem_limit_bytes=_vmem_limit()),
    )(x2d, w, b)


# ---------------------------------------------------------------------------
# Kernel 2: scaled dot-product attention
#   grid = (batch, len_q tiles); all heads per step; K/V for the whole batch element
#   stay resident in VMEM while query rows stream through.
#   - heads sliced from packed (rows, n_head*d) values in VMEM (static lane slices)
#   - mask is per-batch int8, applied as an additive -1e30 bias
#   - all heads merged locally and written with ONE lane-dense (TQ, n_head*d_v) store
#   - probabilities written per head as (n_head, 1, TQ, len_k) in bf16, exact normalisation
# ---------------------------------------------------------------------------
def _attn_body(q, k, v, mask_i8, o_ref, a_ref, *, inv_temp, n_head, d_k, d_v):
    neg_bias = mask_i8.astype(jnp.float32) * jnp.float32(_MASK_BIAS)     # (TQ, len_k)
    ctx = []
    for h in range(n_head):                       # static unroll; n_head is small (2 here)
        qh = q[:, h * d_k:(h + 1) * d_k]          # (TQ, d_k)   bf16
        kh = k[:, h * d_k:(h + 1) * d_k]          # (len_k, d_k) bf16
        vh = v[:, h * d_v:(h + 1) * d_v]          # (len_k, d_v) bf16
        # contract last dims directly (no k.T materialisation), f32 accumulation
        s = lax.dot_general(qh, kh, (((1,), (1,)), ((), ())),
                            preferred_element_type=jnp.float32)
        s = s * jnp.float32(inv_temp) + neg_bias
        s_max = jnp.max(s, axis=-1, keepdims=True)
        e = jnp.exp(s - s_max)
        p = e / jnp.sum(e, axis=-1, keepdims=True)      # exact divide: probs are returned
        ctx.append(jnp.dot(p.astype(v.dtype), vh, preferred_element_type=jnp.float32))
        a_ref[h, 0, :, :] = p.astype(a_ref.dtype)
    # single lane-dense merged-head store (PyTorch head order preserved)
    o_ref[0, :, :] = jnp.concatenate(ctx, axis=-1).astype(o_ref.dtype)


def _attn_kernel_packed(qkvq_ref, qkvkv_ref, m_ref, o_ref, a_ref, *,
                        inv_temp, n_head, d_k, d_v):
    hk, hv = n_head * d_k, n_head * d_v
    q_rows = qkvq_ref[0]                          # (TQ, 2hk+hv)     packed q|k|v
    kv_rows = qkvkv_ref[0]                        # (len_k, 2hk+hv)
    _attn_body(q_rows[:, :hk],
               kv_rows[:, hk:2 * hk],
               kv_rows[:, 2 * hk:2 * hk + hv],
               m_ref[0], o_ref, a_ref,
               inv_temp=inv_temp, n_head=n_head, d_k=d_k, d_v=d_v)


def _attn_kernel_split(q_ref, k_ref, v_ref, m_ref, o_ref, a_ref, *,
                       inv_temp, n_head, d_k, d_v):
    _attn_body(q_ref[0], k_ref[0], v_ref[0], m_ref[0], o_ref, a_ref,
               inv_temp=inv_temp, n_head=n_head, d_k=d_k, d_v=d_v)


def _attn_call(kernel, arrays, in_specs, *, sz_b, len_q, len_k, hv, n_head, tq,
               out_dtype, attn_dtype):
    n_q = len_q // tq
    return pl.pallas_call(
        kernel,
        out_shape=(
            jax.ShapeDtypeStruct((sz_b, len_q, hv), out_dtype),
            jax.ShapeDtypeStruct((n_head, sz_b, len_q, len_k), attn_dtype),
        ),
        grid=(sz_b, n_q),
        in_specs=in_specs,
        out_specs=(
            pl.BlockSpec((1, tq, hv), lambda b, qi: (b, qi, 0)),
            pl.BlockSpec((n_head, 1, tq, len_k), lambda b, qi: (0, b, qi, 0)),
        ),
        compiler_params=pltpu.CompilerParams(
            dimension_semantics=("parallel", "parallel"),
            vmem_limit_bytes=_vmem_limit()),
    )(*arrays)


def attention_packed(qkv3d, mask_i8, *, n_head, d_k, d_v, inv_temp,
                     tile_q=ATTN_TILE_Q, out_dtype=COMPUTE_DTYPE,
                     attn_dtype=jnp.bfloat16):
    """Self-attention fast path: qkv3d is the packed (B, L, 2hk+hv) projection."""
    sz_b, len_q, w = qkv3d.shape
    len_k = len_q
    hv = n_head * d_v
    tq = _pick_tile(len_q, tile_q)
    kernel = functools.partial(_attn_kernel_packed, inv_temp=inv_temp,
                               n_head=n_head, d_k=d_k, d_v=d_v)
    in_specs = [
        pl.BlockSpec((1, tq, w), lambda b, qi: (b, qi, 0)),       # q rows (tiled)
        pl.BlockSpec((1, len_k, w), lambda b, qi: (b, 0, 0)),     # k/v rows (full seq)
        pl.BlockSpec((1, tq, len_k), lambda b, qi: (b, qi, 0)),   # additive mask
    ]
    return _attn_call(kernel, (qkv3d, qkv3d, mask_i8), in_specs,
                      sz_b=sz_b, len_q=len_q, len_k=len_k, hv=hv, n_head=n_head,
                      tq=tq, out_dtype=out_dtype, attn_dtype=attn_dtype)


def attention_split(q3d, k3d, v3d, mask_i8, *, n_head, d_k, d_v, inv_temp,
                    tile_q=ATTN_TILE_Q, out_dtype=COMPUTE_DTYPE,
                    attn_dtype=jnp.bfloat16):
    """General path: separate (B, Lq, hk), (B, Lk, hk), (B, Lk, hv) projections."""
    sz_b, len_q, hk = q3d.shape
    _, len_k, hv = v3d.shape
    tq = _pick_tile(len_q, tile_q)
    kernel = functools.partial(_attn_kernel_split, inv_temp=inv_temp,
                               n_head=n_head, d_k=d_k, d_v=d_v)
    in_specs = [
        pl.BlockSpec((1, tq, hk), lambda b, qi: (b, qi, 0)),
        pl.BlockSpec((1, len_k, hk), lambda b, qi: (b, 0, 0)),
        pl.BlockSpec((1, len_k, hv), lambda b, qi: (b, 0, 0)),
        pl.BlockSpec((1, tq, len_k), lambda b, qi: (b, qi, 0)),
    ]
    return _attn_call(kernel, (q3d, k3d, v3d, mask_i8), in_specs,
                      sz_b=sz_b, len_q=len_q, len_k=len_k, hv=hv, n_head=n_head,
                      tq=tq, out_dtype=out_dtype, attn_dtype=attn_dtype)


# ---------------------------------------------------------------------------
# Kernel 3: output projection + residual + LayerNorm (row-tiled)
#   o = LayerNorm( (ctx @ W_fc + b_fc) + residual )   (dropout identity in eval)
#   ctx arrives bf16 (no f32 round-trip between attention and fc); LN math in f32.
# ---------------------------------------------------------------------------
def _fc_ln_kernel(x_ref, res_ref, w_ref, b_ref, g_ref, beta_ref, o_ref, *,
                  eps, compute_dtype):
    x = x_ref[...].astype(compute_dtype)
    w = w_ref[...].astype(compute_dtype)
    y = jnp.dot(x, w, preferred_element_type=jnp.float32) + b_ref[...].astype(jnp.float32)
    # TODO(synk): nn.Dropout(0.1) omitted -- inference/eval semantics (identity).
    y = y + res_ref[...].astype(jnp.float32)
    mean = jnp.mean(y, axis=-1, keepdims=True)
    var = jnp.mean(jnp.square(y - mean), axis=-1, keepdims=True)
    yn = (y - mean) * lax.rsqrt(var + eps)
    o_ref[...] = (yn * g_ref[...] + beta_ref[...]).astype(o_ref.dtype)


def fc_residual_layernorm(x2d, res2d, w, b, gamma, beta, *, eps=1e-5,
                          out_dtype=jnp.float32, tile_m=DENSE_TILE_M,
                          compute_dtype=COMPUTE_DTYPE):
    n, d_in = x2d.shape
    d_model = w.shape[1]
    tm = min(tile_m, n)
    grid_m = pl.cdiv(n, tm)
    kernel = functools.partial(_fc_ln_kernel, eps=eps, compute_dtype=compute_dtype)
    return pl.pallas_call(
        kernel,
        out_shape=jax.ShapeDtypeStruct((n, d_model), out_dtype),
        grid=(grid_m,),
        in_specs=[
            pl.BlockSpec((tm, d_in), lambda i: (i, 0)),
            pl.BlockSpec((tm, d_model), lambda i: (i, 0)),
            pl.BlockSpec((d_in, d_model), lambda i: (0, 0)),
            pl.BlockSpec((1, d_model), lambda i: (0, 0)),
            pl.BlockSpec((1, d_model), lambda i: (0, 0)),
            pl.BlockSpec((1, d_model), lambda i: (0, 0)),
        ],
        out_specs=pl.BlockSpec((tm, d_model), lambda i: (i, 0)),
        compiler_params=pltpu.CompilerParams(
            dimension_semantics=("parallel",),
            vmem_limit_bytes=_vmem_limit()),
    )(x2d, res2d, w, b, gamma, beta)


# ---------------------------------------------------------------------------
# MultiHeadAttention forward (glue in plain JAX, all hot paths in Pallas kernels)
# ---------------------------------------------------------------------------
def multi_head_attention(params, q, k, v, mask, *, n_head, d_k, d_v, fused_qkv=None):
    sz_b, len_q, d_model = q.shape
    _, len_k, _ = k.shape
    hk, hv = n_head * d_k, n_head * d_v
    inv_temp = 1.0 / math.sqrt(d_k)
    cdt = COMPUTE_DTYPE

    residual2d = q.reshape(sz_b * len_q, d_model)

    if fused_qkv is None:
        # NOTE: object identity fails under jit with separate (equal) tracers; callers
        # should pass the static flag explicitly for the self-attention fast path.
        fused_qkv = (q is k) and (k is v)

    # mask kept per-batch as int8 (not tiled over heads, not float32)
    mask_i8 = jnp.broadcast_to(mask, (sz_b, len_q, len_k)).astype(jnp.int8)

    if fused_qkv:
        # self-attention: fused QKV projection, x read once, ONE packed lane-dense output
        qkv2d = linear(residual2d, params["w_qkv"].astype(cdt), params["b_qkv"],
                       out_dtype=cdt)
        qkv3d = qkv2d.reshape(sz_b, len_q, 2 * hk + hv)
        ctx3d, attn4 = attention_packed(qkv3d, mask_i8, n_head=n_head, d_k=d_k, d_v=d_v,
                                        inv_temp=inv_temp)
    else:
        qp = linear(q.reshape(sz_b * len_q, d_model), params["w_qs"].astype(cdt),
                    params["b_qs"], out_dtype=cdt)
        kp = linear(k.reshape(sz_b * len_k, d_model), params["w_ks"].astype(cdt),
                    params["b_ks"], out_dtype=cdt)
        vp = linear(v.reshape(sz_b * len_k, d_model), params["w_vs"].astype(cdt),
                    params["b_vs"], out_dtype=cdt)
        ctx3d, attn4 = attention_split(qp.reshape(sz_b, len_q, hk),
                                       kp.reshape(sz_b, len_k, hk),
                                       vp.reshape(sz_b, len_k, hv),
                                       mask_i8, n_head=n_head, d_k=d_k, d_v=d_v,
                                       inv_temp=inv_temp)

    out = fc_residual_layernorm(ctx3d.reshape(sz_b * len_q, hv), residual2d,
                                params["w_fc"].astype(cdt), params["b_fc"],
                                params["ln_g"], params["ln_b"],
                                out_dtype=q.dtype).reshape(sz_b, len_q, d_model)

    # (n_head, sz_b, len_q, len_k) -> (n_head*sz_b, len_q, len_k): contiguous view whose
    # row index h*sz_b + b exactly matches the PyTorch module's mask.repeat ordering.
    attn = attn4.reshape(n_head * sz_b, len_q, len_k)
    return out, attn


def init_params(key, n_head, d_model, d_k, d_v):
    ks = jax.random.split(key, 8)

    def lin(kw, kb, d_in, d_out):
        bound = 1.0 / math.sqrt(d_in)
        w = jax.random.uniform(kw, (d_in, d_out), jnp.float32, -bound, bound)
        b = jax.random.uniform(kb, (1, d_out), jnp.float32, -bound, bound)
        return w, b

    w_qs, b_qs = lin(ks[0], ks[1], d_model, n_head * d_k)
    w_ks, b_ks = lin(ks[2], ks[3], d_model, n_head * d_k)
    w_vs, b_vs = lin(ks[4], ks[5], d_model, n_head * d_v)
    w_fc, b_fc = lin(ks[6], ks[7], n_head * d_v, d_model)
    params = {
        "w_qs": w_qs, "b_qs": b_qs,
        "w_ks": w_ks, "b_ks": b_ks,
        "w_vs": w_vs, "b_vs": b_vs,
        "w_fc": w_fc, "b_fc": b_fc,
        "ln_g": jnp.ones((1, d_model), jnp.float32),
        "ln_b": jnp.zeros((1, d_model), jnp.float32),
    }
    # pre-packed fused-QKV weights (self-attention fast path)
    params["w_qkv"] = jnp.concatenate([w_qs, w_ks, w_vs], axis=1)
    params["b_qkv"] = jnp.concatenate([b_qs, b_ks, b_vs], axis=1)
    return params


# ---------------------------------------------------------------------------
# Pure-JAX f32 reference (mirrors the PyTorch module, eval mode)
# ---------------------------------------------------------------------------
def reference_mha(params, q, k, v, mask, *, n_head, d_k, d_v):
    sz_b, len_q, d_model = q.shape
    _, len_k, _ = k.shape
    inv_temp = 1.0 / math.sqrt(d_k)
    qp = q.reshape(-1, d_model) @ params["w_qs"] + params["b_qs"]
    kp = k.reshape(-1, d_model) @ params["w_ks"] + params["b_ks"]
    vp = v.reshape(-1, d_model) @ params["w_vs"] + params["b_vs"]
    qh = jnp.transpose(qp.reshape(sz_b, len_q, n_head, d_k), (2, 0, 1, 3)).reshape(-1, len_q, d_k)
    kh = jnp.transpose(kp.reshape(sz_b, len_k, n_head, d_k), (2, 0, 1, 3)).reshape(-1, len_k, d_k)
    vh = jnp.transpose(vp.reshape(sz_b, len_k, n_head, d_v), (2, 0, 1, 3)).reshape(-1, len_k, d_v)
    m = jnp.tile(jnp.broadcast_to(mask, (sz_b, len_q, len_k)), (n_head, 1, 1))
    s = jnp.einsum("bqd,bkd->bqk", qh, kh) * inv_temp
    s = jnp.where(m, _MASK_BIAS, s)
    p = jax.nn.softmax(s, axis=-1)
    o = jnp.einsum("bqk,bkd->bqd", p, vh)
    o = jnp.transpose(o.reshape(n_head, sz_b, len_q, d_v), (1, 2, 0, 3)).reshape(
        sz_b * len_q, n_head * d_v)
    y = o @ params["w_fc"] + params["b_fc"] + q.reshape(-1, d_model)
    mean = y.mean(-1, keepdims=True)
    var = ((y - mean) ** 2).mean(-1, keepdims=True)
    yn = (y - mean) / jnp.sqrt(var + 1e-5)
    out = (yn * params["ln_g"] + params["ln_b"]).reshape(sz_b, len_q, d_model)
    return out, p


if __name__ == "__main__":
    n_head, d_model, d_k, d_v = 2, 32, 16, 16
    sz_b, seq = 2, 8

    key = jax.random.PRNGKey(0)
    kpar, kx, kq, kk, kv = jax.random.split(key, 5)
    params = init_params(kpar, n_head, d_model, d_k, d_v)

    # key-padding mask: batch 0 sees all 8 keys, batch 1 only the first 6 (True = masked)
    key_valid = jnp.array([[1] * 8, [1] * 6 + [0] * 2], dtype=jnp.bool_)   # (B, len_k)
    mask = jnp.broadcast_to(~key_valid[:, None, :], (sz_b, seq, seq))

    # --- self-attention (q = k = v): fused packed-QKV fast path ---
    x = jax.random.normal(kx, (sz_b, seq, d_model), jnp.float32)
    out_sa, attn_sa = multi_head_attention(params, x, x, x, mask,
                                           n_head=n_head, d_k=d_k, d_v=d_v,
                                           fused_qkv=True)

    # --- distinct q / k / v: per-tensor linear path ---
    q = jax.random.normal(kq, (sz_b, seq, d_model), jnp.float32)
    k = jax.random.normal(kk, (sz_b, seq, d_model), jnp.float32)
    v = jax.random.normal(kv, (sz_b, seq, d_model), jnp.float32)
    out_x, attn_x = multi_head_attention(params, q, k, v, mask,
                                         n_head=n_head, d_k=d_k, d_v=d_v,
                                         fused_qkv=False)

    jax.block_until_ready((out_sa, attn_sa, out_x, attn_x))

    assert out_sa.shape == (sz_b, seq, d_model)
    assert attn_sa.shape == (n_head * sz_b, seq, seq)
    assert out_x.shape == (sz_b, seq, d_model)
    assert attn_x.shape == (n_head * sz_b, seq, seq)
    assert out_sa.dtype == x.dtype

    # numeric check vs pure-JAX f32 reference (tolerance covers bf16 MXU operands)
    ref_out_sa, ref_attn_sa = reference_mha(params, x, x, x, mask,
                                            n_head=n_head, d_k=d_k, d_v=d_v)
    ref_out_x, ref_attn_x = reference_mha(params, q, k, v, mask,
                                          n_head=n_head, d_k=d_k, d_v=d_v)
    for got, want in ((out_sa, ref_out_sa), (attn_sa, ref_attn_sa),
                      (out_x, ref_out_x), (attn_x, ref_attn_x)):
        got32 = jnp.asarray(got, jnp.float32)
        assert bool(jnp.allclose(got32, want, rtol=5e-2, atol=5e-2)), \
            float(jnp.max(jnp.abs(got32 - want)))

    print("KERNEL_OK")
</pallas_src>

<mosaic_0001>
module attributes {stable_mosaic.version = 11 : i64} {
  func.func @_linear_kernel(%arg0: i32, %arg1: memref<16x32xf32, #tpu.memory_space<vmem>>, %arg2: memref<32x96xbf16, #tpu.memory_space<vmem>>, %arg3: memref<1x96xf32, #tpu.memory_space<vmem>>, %arg4: memref<16x96xbf16, #tpu.memory_space<vmem>>) attributes {dimension_semantics = [#tpu.dimension_semantics<parallel>], iteration_bounds = array<i64: 1>, scalar_prefetch = 0 : i64, scratch_operands = 0 : i64, tpu.core_type = #tpu.core_type<tc>, window_params = [{transform_indices = @transform_0, window_bounds = array<i64: 16, 32>}, {pipeline_mode = #tpu.pipeline_mode<synchronous>, transform_indices = @transform_1, window_bounds = array<i64: 32, 96>}, {pipeline_mode = #tpu.pipeline_mode<synchronous>, transform_indices = @transform_2, window_bounds = array<i64: 1, 96>}, {transform_indices = @transform_3, window_bounds = array<i64: 16, 96>}]} {
    %c0 = arith.constant 0 : index
    %c0_0 = arith.constant 0 : index
    %0 = vector.load %arg1[%c0, %c0_0] : memref<16x32xf32, #tpu.memory_space<vmem>>, vector<16x32xf32>
    %1 = arith.truncf %0 : vector<16x32xf32> to vector<16x32xbf16>
    %c0_1 = arith.constant 0 : index
    %c0_2 = arith.constant 0 : index
    %2 = vector.load %arg2[%c0_1, %c0_2] : memref<32x96xbf16, #tpu.memory_space<vmem>>, vector<32x96xbf16>
    %cst = arith.constant dense<0.000000e+00> : vector<16x96xf32>
    %3 = tpu.matmul %1, %2, %cst {dimension_numbers = #tpu.dot_dimension_numbers<[1], [0], [0], [1], [0, 0, 1, 1], [], []>} : vector<16x32xbf16>, vector<32x96xbf16>, vector<16x96xf32> -> vector<16x96xf32>
    %c0_3 = arith.constant 0 : index
    %c0_4 = arith.constant 0 : index
    %4 = vector.load %arg3[%c0_3, %c0_4] : memref<1x96xf32, #tpu.memory_space<vmem>>, vector<1x96xf32>
    %5 = vector.broadcast %4 : vector<1x96xf32> to vector<16x96xf32>
    %6 = arith.addf %3, %5 : vector<16x96xf32>
    %7 = arith.truncf %6 : vector<16x96xf32> to vector<16x96xbf16>
    %c0_5 = arith.constant 0 : index
    %c0_6 = arith.constant 0 : index
    %8 = vector.load %arg4[%c0_5, %c0_6] : memref<16x96xbf16, #tpu.memory_space<vmem>>, vector<16x96xbf16>
    tpu.vector_store %arg4[%c0_5, %c0_6], %7 {strides = array<i32>} : memref<16x96xbf16, #tpu.memory_space<vmem>>, vector<16x96xbf16>,
    return
  }
  func.func @transform_0(%arg0: i32) -> (i32, i32) {
    %c0_i32 = arith.constant 0 : i32
    %c0_i32_0 = arith.constant 0 : i32
    return %arg0, %c0_i32 : i32, i32
  }
  func.func @transform_1(%arg0: i32) -> (i32, i32) {
    %c0_i32 = arith.constant 0 : i32
    %c0_i32_0 = arith.constant 0 : i32
    %c0_i32_1 = arith.constant 0 : i32
    return %c0_i32, %c0_i32_0 : i32, i32
  }
  func.func @transform_2(%arg0: i32) -> (i32, i32) {
    %c0_i32 = arith.constant 0 : i32
    %c0_i32_0 = arith.constant 0 : i32
    %c0_i32_1 = arith.constant 0 : i32
    return %c0_i32, %c0_i32_0 : i32, i32
  }
  func.func @transform_3(%arg0: i32) -> (i32, i32) {
    %c0_i32 = arith.constant 0 : i32
    %c0_i32_0 = arith.constant 0 : i32
    return %arg0, %c0_i32 : i32, i32
  }
}

</mosaic_0001>

<llo_original>
// kernel: tpu_custom_call.1
$region0: #{tpu_custom_call.1}
  #allocation0 [shape = 'u32[]', space=smem, size = 0x4, offset = 0x4, fixed_abs, tag = 'smem constant byte address 0x4 - core index']
  #allocation1 [shape = 'u32[144,128]{1,0:T(1,128)}', space=vmem, size = 0x12000, scoped, tag = 'internal scratch']
  %s0 = inlined_call_operand.hbm [shape: f32[16,32], index: 0, kind: input, shape index: {}]
  %s1 = inlined_call_operand.hbm [shape: bf16[32,96], index: 1, kind: input, shape index: {}]
  %s2 = inlined_call_operand.vmem [shape: f32[1,96], index: 2, kind: input, shape index: {}]
  %s3 = inlined_call_operand.hbm [shape: bf16[16,96], index: 3, kind: output, shape index: {}]
  %s4 = sld [smem:[#allocation0]]
  $region30: #{tpu_custom_call.1} parent=0
    _
  %s6 = ssub.s32 1, %s4
  %s7 = scalar_select 0, %s6, %s4
  $region1: #{tpu_custom_call.1} parent=0
    #allocation2 [shape = 'u8[8192]{0}', space=vmem, size = 0x2000, scoped, tag = 'input window, operand 0, single buffered']
    #allocation3 [shape = 's32[1]{0}', space=sflag, size = 0x4, scoped, tag = 'scoped memory for tpu_custom_call.1']
    #allocation4 [shape = 's32[1]{0}', space=sflag, size = 0x4, scoped, tag = 'scoped memory for tpu_custom_call.1']
    #allocation5 [shape = 'u8[8192]{0}', space=vmem, size = 0x2000, scoped, tag = 'input window, operand 1, single buffered']
    #allocation6 [shape = 's32[1]{0}', space=sflag, size = 0x4, scoped, tag = 'scoped memory for tpu_custom_call.1']
    #allocation7 [shape = 'u8[4096]{0}', space=vmem, size = 0x1000, scoped, tag = 'output window, operand 0, single buffered']
    %8 = vsyncpa [#allocation3], 0
    %9 = vsyncpa [#allocation6], 0
    %10 = vsyncpa [#allocation4], 0
    // Predicated region
    $region2: #{tpu_custom_call.1} parent=1 // pred_check
      _
    $region3: #{tpu_custom_call.1} parent=1 // pred_check_branch
      %12 = sbr.rel (0) target = $region5
    $region4: #{tpu_custom_call.1} parent=1 // pred_region
      %s14 = ssub.s32 256, 256
      %15 = vsyncadd [#allocation3], %s14
      %s16 = sshll.u32 [#allocation2], 4
      %s17 = int_to_ptr.vmem [resolvable:$true] %s16
      %22 = dma.hbm_to_vmem [thread:$0]  %s0, 256, %s17, [#allocation3], 128, 128, 8
    $region5: #{tpu_custom_call.1} parent=1 // pred_fallthru
      _
    // Predicated region
    $region6: #{tpu_custom_call.1} parent=1 // pred_check
      _
    $region7: #{tpu_custom_call.1} parent=1 // pred_check_branch
      %24 = sbr.rel (0) target = $region9
    $region8: #{tpu_custom_call.1} parent=1 // pred_region
      %s26 = ssub.s32 256, 256
      %27 = vsyncadd [#allocation6], %s26
      %s28 = sshll.u32 [#allocation5], 4
      %s29 = int_to_ptr.vmem [resolvable:$true] %s28
      %34 = dma.hbm_to_vmem [thread:$0]  %s1, 256, %s29, [#allocation6], 64, 64, 4
    $region9: #{tpu_custom_call.1} parent=1 // pred_fallthru
      _
    // Predicated region
    $region10: #{tpu_custom_call.1} parent=1 // pred_check
      _
    $region11: #{tpu_custom_call.1} parent=1 // pred_check_branch
      %36 = sbr.rel (0) target = $region13
    $region12: #{tpu_custom_call.1} parent=1 // pred_region
      _
    $region13: #{tpu_custom_call.1} parent=1 // pred_fallthru
      _
    // Predicated region
    $region14: #{tpu_custom_call.1} parent=1 // pred_check
      _
    $region15: #{tpu_custom_call.1} parent=1 // pred_check_branch
      %38 = sbr.rel (0) target = $region17
    $region16: #{tpu_custom_call.1} parent=1 // pred_region
      %39 = dma.done [#allocation3], 256
    $region17: #{tpu_custom_call.1} parent=1 // pred_fallthru
      _
    // Predicated region
    $region18: #{tpu_custom_call.1} parent=1 // pred_check
      _
    $region19: #{tpu_custom_call.1} parent=1 // pred_check_branch
      %41 = sbr.rel (0) target = $region21
    $region20: #{tpu_custom_call.1} parent=1 // pred_region
      %42 = dma.done [#allocation6], 256
    $region21: #{tpu_custom_call.1} parent=1 // pred_fallthru
      _
    %v44 = vld [vmem:[#allocation2] sm:$0xff]
    %v45 = vld [vmem:[#allocation2 + $0x8] sm:$0xff]
    %v46 = vpack.c.bf16 %v45, %v44
    %v47 = vld [vmem:[#allocation5] sm:$0xf]
    %v48 = vld [vmem:[#allocation5 + $0x4] sm:$0xf]
    %v49 = vld [vmem:[#allocation5 + $0x8] sm:$0xf]
    %v50 = vld [vmem:[#allocation5 + $0xc] sm:$0xf]
    %v51 = vld [vmem:[%s2] sm:$0x1]
    %v53 = vlaneseq
    %v54 = vshrl.u32 %v53, 7
    %v55 = vsub.s32 0, %v54
    %v56 = vrot.slane %v51, %v55
    %v62 = vunpack.c.l.b16 %v47
    %v63 = vunpack.c.l.b16 %v48
    %v64 = vunpack.c.l.b16 %v49
    %v65 = vunpack.c.l.b16 %v50
    %v66 = vpack.c.b16 %v63, %v62
    %v67 = vpack.c.b16 %v65, %v64
    %vm70 = vcmask 261120
    %v72 = vsel %vm70, %v46, 0
    %74 = vmatprep.subr.bf16.mxu0 0
    %75 = vmatpush1.bf16.msra.mxu0 %v66
    %76 = vmatprep.subr.bf16.mxu0 0
    %77 = vmatpush1.bf16.msra.mxu0 %v67
    %78 = vmatprep.subr.bf16.mxu0 0
    %79 = vmatpush1.bf16.msra.mxu0 0
    %80 = vmatprep.subr.bf16.mxu0 0
    %81 = vmatpush1.bf16.msra.mxu0 0
    %82 = vmatprep.subr.bf16.mxu0 0
    %83 = vmatpush1.bf16.msra.mxu0 0
    %84 = vmatprep.subr.bf16.mxu0 0
    %85 = vmatpush1.bf16.msra.mxu0 0
    %86 = vmatprep.subr.bf16.mxu0 0
    %87 = vmatpush1.bf16.msra.mxu0 0
    %88 = vmatprep.subr.bf16.mxu0 0
    %89 = vmatpush1.bf16.msra.mxu0 0
    %90 = vmatprep.subr.bf16.mxu0 0
    %91 = vmatpush1.bf16.msra.mxu0 0
    %92 = vmatprep.subr.bf16.mxu0 0
    %93 = vmatpush1.bf16.msra.mxu0 0
    %94 = vmatprep.subr.bf16.mxu0 0
    %95 = vmatpush1.bf16.msra.mxu0 0
    %96 = vmatprep.subr.bf16.mxu0 0
    %97 = vmatpush1.bf16.msra.mxu0 0
    %98 = vmatprep.subr.bf16.mxu0 0
    %99 = vmatpush1.bf16.msra.mxu0 0
    %100 = vmatprep.subr.bf16.mxu0 0
    %101 = vmatpush1.bf16.msra.mxu0 0
    %102 = vmatprep.subr.bf16.mxu0 0
    %103 = vmatpush1.bf16.msra.mxu0 0
    %104 = vmatprep.subr.bf16.mxu0 0
    %105 = vmatpush1.bf16.msra.mxu0 0
    %106 = vmatprep.mubr.bf16.mxu0 0
    %107 = vmatmul.mubr.bf16.gmra.mrb[0].mxu0 %v72
    %v108 = vpop.f32.mrb[0].mxu0
    %v109 = vadd.f32 %v56, %v108
    %v110 = vpop.f32.mrb[0].mxu0
    %v111 = vpop.f32.mrb[0].mxu0
    %v112 = vadd.f32 %v56, %v111
    %v113 = vpop.f32.mrb[0].mxu0
    %114 = vdwg.mxu0
    %v115 = vpack.c.bf16 %v112, %v109
    %v117 = vunpack.c.l.b16 %v115
    %v118 = vunpack.c.h.b16 %v115
    %v119 = vpack.c.b16 %v117, %v117
    %v120 = vpack.c.b16 %v118, %v118
    %vm123 = vcmask 781312
    %124 = vst.msk [vmem:[#allocation7] sm:$0xf] %vm123, %v119
    %125 = vst.msk [vmem:[#allocation7 + $0x4] sm:$0xf] %vm123, %v120
    // Predicated region
    $region22: #{tpu_custom_call.1} parent=1 // pred_check
      _
    $region23: #{tpu_custom_call.1} parent=1 // pred_check_branch
      %127 = sbr.rel (0) target = $region25
    $region24: #{tpu_custom_call.1} parent=1 // pred_region
      %s129 = ssub.s32 128, 128
      %130 = vsyncadd [#allocation4], %s129
      %s131 = sshll.u32 [#allocation7], 4
      %s132 = int_to_ptr.vmem [resolvable:$true] %s131
      %137 = dma.vmem_to_hbm [thread:$0]  %s132, 128, %s3, [#allocation4], 64, 64, 4
    $region25: #{tpu_custom_call.1} parent=1 // pred_fallthru
      _
    // Predicated region
    $region26: #{tpu_custom_call.1} parent=1 // pred_check
      _
    $region27: #{tpu_custom_call.1} parent=1 // pred_check_branch
      %139 = sbr.rel (0) target = $region29
    $region28: #{tpu_custom_call.1} parent=1 // pred_region
      %140 = dma.done [#allocation4], 128
    $region29: #{tpu_custom_call.1} parent=1 // pred_fallthru
      _
    %141 = vsyncpa [#allocation3], 1
    %142 = vsyncpa [#allocation6], 1
    %143 = vsyncpa [#allocation4], 1

</llo_original>
